<compile_context>
chip_gen: v7x
topology: tpu7x:2x2x1
jax: 0.10.0
libtpu: 0.0.40
codegen_flags: <defaults>
</compile_context>

<pallas_src>
import jax
import jax.numpy as jnp
from jax.experimental import pallas as pl
from jax.experimental.pallas import tpu as pltpu

_LANES = 128
_SUBCHUNK = 4096  # lane width processed per unrolled step inside the kernel


def _lane_partial(v):
    """Fold (..., W) down to (..., 128) column sums using only 128-aligned static
    lane slices + VPU adds (no cross-lane XLU work).  W is a power-of-two multiple
    of 128 by construction of the tile chooser."""
    w = v.shape[-1]
    while w > _LANES and w % (2 * _LANES) == 0:
        h = w // 2
        v = v[..., :h] + v[..., h:]
        w = h
    if w > _LANES:  # defensive fallback for odd multiples of 128 (not produced here)
        acc = v[..., :_LANES]
        for i in range(1, w // _LANES):
            acc = acc + v[..., i * _LANES:(i + 1) * _LANES]
        v = acc
    return v


def _iou_stats_kernel(x_ref, gt_ref, out_ref, acc_ref):
    # x_ref  : (Bg, C, T) float    -- probabilities
    # gt_ref : (Bg, 1, T) int32    -- label map (padding lanes hold value C)
    # out_ref: (Bg, C, 3) float32  -- per-(b, c) [tp, sum_x, cnt], written on last step
    # acc_ref: (Bg, C, 3*128) f32  -- lane-partial accumulator, resident across steps
    s = pl.program_id(1)
    num_s = pl.num_programs(1)

    @pl.when(s == 0)
    def _init():
        acc_ref[...] = jnp.zeros_like(acc_ref)

    bg, num_classes, t = x_ref.shape
    w = min(t, _SUBCHUNK)
    n_sub = t // w

    cls = jax.lax.broadcasted_iota(jnp.int32, (1, num_classes, 1), 1)

    tp_acc = jnp.zeros((bg, num_classes, _LANES), jnp.float32)
    sx_acc = jnp.zeros((bg, num_classes, _LANES), jnp.float32)
    cnt_acc = jnp.zeros((bg, num_classes, _LANES), jnp.float32)

    # Bounded static unroll over 128-aligned lane sub-chunks keeps temporaries small.
    for i in range(n_sub):
        xc = x_ref[:, :, i * w:(i + 1) * w].astype(jnp.float32)   # (Bg, C, W)
        gc = gt_ref[:, :, i * w:(i + 1) * w]                      # (Bg, 1, W)
        mask = gc == cls                                          # (Bg, C, W) one-hot
        tp_acc = tp_acc + _lane_partial(jnp.where(mask, xc, 0.0))
        sx_acc = sx_acc + _lane_partial(xc)
        cnt_acc = cnt_acc + _lane_partial(mask.astype(jnp.float32))

    acc_ref[...] += jnp.concatenate([tp_acc, sx_acc, cnt_acc], axis=-1)

    @pl.when(s == num_s - 1)
    def _finalize():
        acc = acc_ref[...]
        tp = jnp.sum(acc[..., 0 * _LANES:1 * _LANES], axis=-1, keepdims=True)
        sx = jnp.sum(acc[..., 1 * _LANES:2 * _LANES], axis=-1, keepdims=True)
        cnt = jnp.sum(acc[..., 2 * _LANES:3 * _LANES], axis=-1, keepdims=True)
        out_ref[...] = jnp.concatenate([tp, sx, cnt], axis=-1)


def _round_up(a, b):
    return ((a + b - 1) // b) * b


def _hw_params():
    """Generation-aware (DMA block budget, vmem_limit_bytes)."""
    try:
        vmem_cap = pltpu.get_tpu_info().vmem_capacity_bytes
    except Exception:
        vmem_cap = 64 * 1024 * 1024
    if vmem_cap >= 96 * 1024 * 1024:           # v5e / v6e class: 128 MiB VMEM
        return 28 * 1024 * 1024, 64 * 1024 * 1024
    return 16 * 1024 * 1024, 40 * 1024 * 1024  # v7x class: 64 MiB VMEM per core


def _choose_spatial_tile(hw, per_lane_bytes, dma_budget):
    """Largest power-of-two multiple of 128 lanes whose double-buffered input
    footprint fits the budget, avoiding >25% padding waste."""
    hw128 = _round_up(hw, _LANES)
    t = _LANES
    while t < hw128 and per_lane_bytes * (2 * t) <= dma_budget:
        t *= 2
    while t > _LANES:
        padded = _round_up(hw, t)
        if 4 * (padded - hw) <= padded:
            break
        t //= 2
    return t


def iou_loss(x, y, smooth=1.0):
    """IoULoss.forward with default ctor args.

    x: (B, C, H, W) float probabilities (apply_nonlin=None)
    y: (B, 1, H, W) or (B, H, W) integer label map with values in [0, C)
    """
    B, C = x.shape[0], x.shape[1]
    HW = 1
    for d in x.shape[2:]:
        HW *= d

    x3 = x.reshape(B, C, HW)
    gt3 = y.reshape(B, 1, HW).astype(jnp.int32)

    # Batch groups: "parallel" grid axis (2 groups when B is even -> both v7x cores).
    G = 2 if (B % 2 == 0 and B >= 2) else 1
    Bg = B // G

    # Spatial lane tile from the generation-aware VMEM budget.
    x_item = x.dtype.itemsize
    sub_mult = 8 if x_item >= 4 else (16 if x_item == 2 else 32)
    x_lane = Bg * _round_up(C, sub_mult) * x_item   # padded x bytes per lane column
    gt_lane = Bg * 8 * 4                            # (Bg,1,T) int32 padded to 8 sublanes
    per_lane = 2 * (x_lane + gt_lane)               # double-buffered inputs
    dma_budget, vmem_limit = _hw_params()
    T = _choose_spatial_tile(HW, per_lane, dma_budget)

    HW_pad = _round_up(HW, T)
    if HW_pad != HW:
        pad = HW_pad - HW
        x3 = jnp.pad(x3, ((0, 0), (0, 0), (0, pad)))                       # zeros: no tp/sum_x
        gt3 = jnp.pad(gt3, ((0, 0), (0, 0), (0, pad)), constant_values=C)  # out-of-range: no cnt
    S = HW_pad // T

    out = pl.pallas_call(
        _iou_stats_kernel,
        out_shape=jax.ShapeDtypeStruct((B, C, 3), jnp.float32),
        grid_spec=pltpu.PrefetchScalarGridSpec(
            num_scalar_prefetch=0,
            grid=(G, S),
            in_specs=[
                pl.BlockSpec((Bg, C, T), lambda g, s: (g, 0, s)),
                pl.BlockSpec((Bg, 1, T), lambda g, s: (g, 0, s)),
            ],
            out_specs=pl.BlockSpec((Bg, C, 3), lambda g, s: (g, 0, 0)),
            scratch_shapes=[pltpu.VMEM((Bg, C, 3 * _LANES), jnp.float32)],
        ),
        compiler_params=pltpu.CompilerParams(
            dimension_semantics=("parallel", "arbitrary"),
            vmem_limit_bytes=vmem_limit,
        ),
    )(x3, gt3)

    tp = out[..., 0]
    sum_x = out[..., 1]
    cnt = out[..., 2]
    fp = sum_x - tp   # == sum_p x * (1 - onehot)
    fn = cnt - tp     # == sum_p (1 - x) * onehot

    # do_bg=True: keep all classes; batch_dice=False: per-(b, c) IoU; mean; negate.
    iou = (tp + smooth) / (tp + fp + fn + smooth)
    return -jnp.mean(iou)


def _reference_iou_loss(x, y, smooth=1.0):
    B, C, H, W = x.shape
    gt = y.reshape(B, 1, H, W).astype(jnp.int32)
    y_onehot = (jnp.arange(C, dtype=jnp.int32)[None, :, None, None] == gt).astype(x.dtype)
    tp = jnp.sum(x * y_onehot, axis=(2, 3))
    fp = jnp.sum(x * (1.0 - y_onehot), axis=(2, 3))
    fn = jnp.sum((1.0 - x) * y_onehot, axis=(2, 3))
    iou = (tp + smooth) / (tp + fp + fn + smooth)
    return -jnp.mean(iou)


if __name__ == "__main__":
    key = jax.random.PRNGKey(0)
    kx, ky = jax.random.split(key)

    B, C, H, W = 2, 4, 16, 16
    logits = jax.random.normal(kx, (B, C, H, W), dtype=jnp.float32)
    # module default apply_nonlin=None: feed probability-like inputs directly
    x = jax.nn.softmax(logits, axis=1)
    y = jax.random.randint(ky, (B, 1, H, W), 0, C, dtype=jnp.int32)

    loss = jax.jit(iou_loss)(x, y)
    jax.block_until_ready(loss)

    ref = _reference_iou_loss(x, y)
    assert jnp.allclose(loss, ref, atol=1e-5, rtol=1e-5), (loss, ref)

    print("KERNEL_OK")
</pallas_src>

<mosaic_0001>
module attributes {stable_mosaic.version = 11 : i64} {
  func.func @_iou_stats_kernel(%arg0: i32, %arg1: i32, %arg2: memref<1x4x256xf32, #tpu.memory_space<vmem>>, %arg3: memref<1x1x256xi32, #tpu.memory_space<vmem>>, %arg4: memref<1x4x3xf32, #tpu.memory_space<vmem>>, %arg5: memref<1x4x384xf32, #tpu.memory_space<vmem>>) attributes {dimension_semantics = [#tpu.dimension_semantics<parallel>, #tpu.dimension_semantics<arbitrary>], iteration_bounds = array<i64: 2, 1>, scalar_prefetch = 0 : i64, scratch_operands = 1 : i64, tpu.core_type = #tpu.core_type<tc>, window_params = [{transform_indices = @transform_0, window_bounds = array<i64: 1, 4, 256>}, {transform_indices = @transform_1, window_bounds = array<i64: 1, 1, 256>}, {transform_indices = @transform_2, window_bounds = array<i64: 1, 4, 3>}]} {
    %c0_i32 = arith.constant 0 : i32
    %0 = arith.cmpi eq, %arg1, %c0_i32 : i32
    %1 = arith.extui %0 : i1 to i32
    %c0_i32_0 = arith.constant 0 : i32
    %2 = arith.cmpi ne, %1, %c0_i32_0 : i32
    scf.if %2 {
      %cst_17 = arith.constant 0.000000e+00 : f32
      %35 = vector.broadcast %cst_17 : f32 to vector<1x4x384xf32>
      %c0_18 = arith.constant 0 : index
      %c0_19 = arith.constant 0 : index
      %c0_20 = arith.constant 0 : index
      %36 = vector.load %arg5[%c0_18, %c0_19, %c0_20] : memref<1x4x384xf32, #tpu.memory_space<vmem>>, vector<1x4x384xf32>
      tpu.vector_store %arg5[%c0_18, %c0_19, %c0_20], %35 {strides = array<i32>} : memref<1x4x384xf32, #tpu.memory_space<vmem>>, vector<1x4x384xf32>,
    } else {
    }
    %3 = tpu.iota {dimensions = array<i32: 1>} : vector<1x4x1xi32>
    %cst = arith.constant 0.000000e+00 : f32
    %4 = vector.broadcast %cst : f32 to vector<1x4x128xf32>
    %cst_1 = arith.constant 0.000000e+00 : f32
    %5 = vector.broadcast %cst_1 : f32 to vector<1x4x128xf32>
    %cst_2 = arith.constant 0.000000e+00 : f32
    %6 = vector.broadcast %cst_2 : f32 to vector<1x4x128xf32>
    %c0 = arith.constant 0 : index
    %c0_3 = arith.constant 0 : index
    %c0_4 = arith.constant 0 : index
    %7 = vector.load %arg2[%c0, %c0_3, %c0_4] : memref<1x4x256xf32, #tpu.memory_space<vmem>>, vector<1x4x256xf32>
    %c0_5 = arith.constant 0 : index
    %c0_6 = arith.constant 0 : index
    %c0_7 = arith.constant 0 : index
    %8 = vector.load %arg3[%c0_5, %c0_6, %c0_7] : memref<1x1x256xi32, #tpu.memory_space<vmem>>, vector<1x1x256xi32>
    %9 = vector.broadcast %8 : vector<1x1x256xi32> to vector<1x4x256xi32>
    %10 = vector.broadcast %3 : vector<1x4x1xi32> to vector<1x4x256xi32>
    %11 = arith.cmpi eq, %9, %10 : vector<1x4x256xi32>
    %cst_8 = arith.constant 0.000000e+00 : f32
    %12 = vector.broadcast %cst_8 : f32 to vector<1x4x256xf32>
    %13 = arith.select %11, %7, %12 : vector<1x4x256xi1>, vector<1x4x256xf32>
    %14 = vector.extract_strided_slice %13 {offsets = [0, 0, 0], sizes = [1, 4, 128], strides = [1, 1, 1]} : vector<1x4x256xf32> to vector<1x4x128xf32>
    %15 = vector.extract_strided_slice %13 {offsets = [0, 0, 128], sizes = [1, 4, 128], strides = [1, 1, 1]} : vector<1x4x256xf32> to vector<1x4x128xf32>
    %16 = arith.addf %14, %15 : vector<1x4x128xf32>
    %17 = arith.addf %4, %16 : vector<1x4x128xf32>
    %18 = vector.extract_strided_slice %7 {offsets = [0, 0, 0], sizes = [1, 4, 128], strides = [1, 1, 1]} : vector<1x4x256xf32> to vector<1x4x128xf32>
    %19 = vector.extract_strided_slice %7 {offsets = [0, 0, 128], sizes = [1, 4, 128], strides = [1, 1, 1]} : vector<1x4x256xf32> to vector<1x4x128xf32>
    %20 = arith.addf %18, %19 : vector<1x4x128xf32>
    %21 = arith.addf %5, %20 : vector<1x4x128xf32>
    %22 = arith.extui %11 : vector<1x4x256xi1> to vector<1x4x256xi32>
    %23 = arith.sitofp %22 : vector<1x4x256xi32> to vector<1x4x256xf32>
    %24 = vector.extract_strided_slice %23 {offsets = [0, 0, 0], sizes = [1, 4, 128], strides = [1, 1, 1]} : vector<1x4x256xf32> to vector<1x4x128xf32>
    %25 = vector.extract_strided_slice %23 {offsets = [0, 0, 128], sizes = [1, 4, 128], strides = [1, 1, 1]} : vector<1x4x256xf32> to vector<1x4x128xf32>
    %26 = arith.addf %24, %25 : vector<1x4x128xf32>
    %27 = arith.addf %6, %26 : vector<1x4x128xf32>
    %c0_9 = arith.constant 0 : index
    %c0_10 = arith.constant 0 : index
    %c0_11 = arith.constant 0 : index
    %28 = vector.load %arg5[%c0_9, %c0_10, %c0_11] : memref<1x4x384xf32, #tpu.memory_space<vmem>>, vector<1x4x384xf32>
    %29 = tpu.concatenate %17, %21, %27 in 2 : vector<1x4x128xf32>, vector<1x4x128xf32>, vector<1x4x128xf32> -> vector<1x4x384xf32>
    %30 = arith.addf %28, %29 : vector<1x4x384xf32>
    %c0_12 = arith.constant 0 : index
    %c0_13 = arith.constant 0 : index
    %c0_14 = arith.constant 0 : index
    %31 = vector.load %arg5[%c0_12, %c0_13, %c0_14] : memref<1x4x384xf32, #tpu.memory_space<vmem>>, vector<1x4x384xf32>
    tpu.vector_store %arg5[%c0_12, %c0_13, %c0_14], %30 {strides = array<i32>} : memref<1x4x384xf32, #tpu.memory_space<vmem>>, vector<1x4x384xf32>,
    %c0_i32_15 = arith.constant 0 : i32
    %32 = arith.cmpi eq, %arg1, %c0_i32_15 : i32
    %33 = arith.extui %32 : i1 to i32
    %c0_i32_16 = arith.constant 0 : i32
    %34 = arith.cmpi ne, %33, %c0_i32_16 : i32
    scf.if %34 {
      %c0_17 = arith.constant 0 : index
      %c0_18 = arith.constant 0 : index
      %c0_19 = arith.constant 0 : index
      %35 = vector.load %arg5[%c0_17, %c0_18, %c0_19] : memref<1x4x384xf32, #tpu.memory_space<vmem>>, vector<1x4x384xf32>
      %36 = vector.extract_strided_slice %35 {offsets = [0, 0, 0], sizes = [1, 4, 128], strides = [1, 1, 1]} : vector<1x4x384xf32> to vector<1x4x128xf32>
      %cst_20 = arith.constant dense<0.000000e+00> : vector<1x4xf32>
      %37 = vector.multi_reduction <add>, %36, %cst_20 [2] : vector<1x4x128xf32> to vector<1x4xf32>
      %38 = vector.shape_cast %37 : vector<1x4xf32> to vector<1x4x1xf32>
      %39 = vector.extract_strided_slice %35 {offsets = [0, 0, 128], sizes = [1, 4, 128], strides = [1, 1, 1]} : vector<1x4x384xf32> to vector<1x4x128xf32>
      %cst_21 = arith.constant dense<0.000000e+00> : vector<1x4xf32>
      %40 = vector.multi_reduction <add>, %39, %cst_21 [2] : vector<1x4x128xf32> to vector<1x4xf32>
      %41 = vector.shape_cast %40 : vector<1x4xf32> to vector<1x4x1xf32>
      %42 = vector.extract_strided_slice %35 {offsets = [0, 0, 256], sizes = [1, 4, 128], strides = [1, 1, 1]} : vector<1x4x384xf32> to vector<1x4x128xf32>
      %cst_22 = arith.constant dense<0.000000e+00> : vector<1x4xf32>
      %43 = vector.multi_reduction <add>, %42, %cst_22 [2] : vector<1x4x128xf32> to vector<1x4xf32>
      %44 = vector.shape_cast %43 : vector<1x4xf32> to vector<1x4x1xf32>
      %45 = tpu.concatenate %38, %41, %44 in 2 : vector<1x4x1xf32>, vector<1x4x1xf32>, vector<1x4x1xf32> -> vector<1x4x3xf32>
      %c0_23 = arith.constant 0 : index
      %c0_24 = arith.constant 0 : index
      %c0_25 = arith.constant 0 : index
      %46 = vector.load %arg4[%c0_23, %c0_24, %c0_25] : memref<1x4x3xf32, #tpu.memory_space<vmem>>, vector<1x4x3xf32>
      tpu.vector_store %arg4[%c0_23, %c0_24, %c0_25], %45 {strides = array<i32>} : memref<1x4x3xf32, #tpu.memory_space<vmem>>, vector<1x4x3xf32>,
    } else {
    }
    return
  }
  func.func @transform_0(%arg0: i32, %arg1: i32) -> (i32, i32, i32) {
    %c0_i32 = arith.constant 0 : i32
    %c0_i32_0 = arith.constant 0 : i32
    return %arg0, %c0_i32, %arg1 : i32, i32, i32
  }
  func.func @transform_1(%arg0: i32, %arg1: i32) -> (i32, i32, i32) {
    %c0_i32 = arith.constant 0 : i32
    %c0_i32_0 = arith.constant 0 : i32
    return %arg0, %c0_i32, %arg1 : i32, i32, i32
  }
  func.func @transform_2(%arg0: i32, %arg1: i32) -> (i32, i32, i32) {
    %c0_i32 = arith.constant 0 : i32
    %c0_i32_0 = arith.constant 0 : i32
    %c0_i32_1 = arith.constant 0 : i32
    return %arg0, %c0_i32, %c0_i32_0 : i32, i32, i32
  }
}

</mosaic_0001>

<llo_original>
// kernel: iou_loss.1
$region0: #{iou_loss.1}
  #allocation0 [shape = 'u32[]', space=smem, size = 0x4, offset = 0x4, fixed_abs, tag = 'smem constant byte address 0x4 - core index']
  #allocation1 [shape = 'u32[144,128]{1,0:T(1,128)}', space=vmem, size = 0x12000, scoped, tag = 'internal scratch']
  #allocation2 [shape = 'f32[1,4,384]{2,1,0:T(4,128)}', space=vmem, size = 0x1800, scoped, tag = 'scratch operand']
  %s0 = inlined_call_operand.vmem [shape: f32[2,4,256], index: 0, kind: input, shape index: {}]
  %s1 = inlined_call_operand.vmem [shape: s32[2,1,256], index: 1, kind: input, shape index: {}]
  %s2 = inlined_call_operand.vmem [shape: f32[2,4,3], index: 2, kind: output, shape index: {}]
  %s3 = sld [smem:[#allocation0]]
  $region49: #{iou_loss.1} parent=0
    _
  %s5 = ssub.s32 1, %s3
  %s6 = scalar_select 0, %s5, %s3
  loop: start=0, step=1, limit=4
  $region2: #{iou_loss.1} parent=0 // loop_pre_header
    _
  $region3: #{iou_loss.1} parent=0 // loop_header
    %s8 = sphi 0, %s12
    %p9 = scmp.ge.s32.totalorder %s8, 4
    %s15 = sphi 0, %s27
    %s16 = sphi 0, %s23
    %s17 = sphi 0, %s15
    %s18 = sphi 0, %s16
    %s19 = sphi 0, %s17
    %s20 = sphi 0, %s18
    %s32 = sphi 0, %s34
    %s35 = sphi 0, %s32
    %s36 = sphi 0, %s35
    %s52 = sphi 0, %s36
    %s60 = sphi 0, %s62
    %s63 = sphi 0, %s60
    %s64 = sphi 0, %s63
    %s80 = sphi 0, %s64
    %s86 = sphi 0, %s88
    %s89 = sphi 0, %s86
    %s90 = sphi 0, %s89
    %s106 = sphi 0, %s90
  $region4: #{iou_loss.1} parent=0 // loop_header_branch
    %11 = sbr.rel (%p9) target = $region8
  $region5: #{iou_loss.1} parent=0 // loop_body
    %s13 = ssub.s32 %s8, 1
    %s14 = ssub.s32 %s8, 2
    %s21 = sadd.s32 1, %s16
    %p22 = scmp.ge.s32.totalorder %s21, 1
    %s23 = scalar_select %p22, 0, %s21
    %s24 = sadd.s32 1, %s15
    %s25 = scalar_select %p22, %s24, %s15
    %p26 = scmp.ge.s32.totalorder %s25, 2
    %s27 = scalar_select %p26, 0, %s25
    %s28 = ssub.s32 %s15, %s27
    %s29 = ssub.s32 %s16, %s23
    %s30 = sor.u32 %s28, %s29
    %p31 = scmp.eq.s32.totalorder %s30, 0
    %s33 = sadd.s32 %s32, 1
    %s34 = scalar_select %p31, %s32, %s33
    %p37 = pneg %p31
    %p38 = scmp.eq.s32.totalorder %s8, 1
    %p39 = por %p37, %p38
    %p40 = scmp.ne.s32.totalorder %s32, %s35
    %p41 = scmp.eq.s32.totalorder %s8, 0
    %p42 = por %p40, %p41
    %p43 = scmp.ne.s32.totalorder %s32, %s35
    %p44 = scmp.eq.s32.totalorder %s13, 1
    %p45 = por %p43, %p44
    %p46 = scmp.ne.s32.totalorder %s35, %s36
    %p47 = scmp.eq.s32.totalorder %s13, 0
    %p48 = por %p46, %p47
    %p49 = scmp.ne.s32.totalorder %s35, %s36
    %p50 = scmp.eq.s32.totalorder %s14, 1
    %p51 = por %p49, %p50
    %p53 = scmp.ne.s32.totalorder %s36, %s52
    %p54 = scmp.eq.s32.totalorder %s14, 0
    %p55 = por %p53, %p54
    %s56 = ssub.s32 %s15, %s27
    %s57 = ssub.s32 %s16, %s23
    %s58 = sor.u32 %s56, %s57
    %p59 = scmp.eq.s32.totalorder %s58, 0
    %s61 = sadd.s32 %s60, 1
    %s62 = scalar_select %p59, %s60, %s61
    %p65 = pneg %p59
    %p66 = scmp.eq.s32.totalorder %s8, 1
    %p67 = por %p65, %p66
    %p68 = scmp.ne.s32.totalorder %s60, %s63
    %p69 = scmp.eq.s32.totalorder %s8, 0
    %p70 = por %p68, %p69
    %p71 = scmp.ne.s32.totalorder %s60, %s63
    %p72 = scmp.eq.s32.totalorder %s13, 1
    %p73 = por %p71, %p72
    %p74 = scmp.ne.s32.totalorder %s63, %s64
    %p75 = scmp.eq.s32.totalorder %s13, 0
    %p76 = por %p74, %p75
    %p77 = scmp.ne.s32.totalorder %s63, %s64
    %p78 = scmp.eq.s32.totalorder %s14, 1
    %p79 = por %p77, %p78
    %p81 = scmp.ne.s32.totalorder %s64, %s80
    %p82 = scmp.eq.s32.totalorder %s14, 0
    %p83 = por %p81, %p82
    %s84 = ssub.s32 %s15, %s27
    %p85 = scmp.eq.s32.totalorder %s84, 0
    %s87 = sadd.s32 %s86, 1
    %s88 = scalar_select %p85, %s86, %s87
    %p91 = pneg %p85
    %p92 = scmp.eq.s32.totalorder %s8, 1
    %p93 = por %p91, %p92
    %p94 = scmp.ne.s32.totalorder %s86, %s89
    %p95 = scmp.eq.s32.totalorder %s8, 0
    %p96 = por %p94, %p95
    %p97 = scmp.ne.s32.totalorder %s86, %s89
    %p98 = scmp.eq.s32.totalorder %s13, 1
    %p99 = por %p97, %p98
    %p100 = scmp.ne.s32.totalorder %s89, %s90
    %p101 = scmp.eq.s32.totalorder %s13, 0
    %p102 = por %p100, %p101
    %p103 = scmp.ne.s32.totalorder %s89, %s90
    %p104 = scmp.eq.s32.totalorder %s14, 1
    %p105 = por %p103, %p104
    %p107 = scmp.ne.s32.totalorder %s90, %s106
    %p108 = scmp.eq.s32.totalorder %s14, 0
    %p109 = por %p107, %p108
    %p110 = scmp.le.s32.totalorder 1, %s8
    %p111 = scmp.lt.s32.totalorder %s8, 3
    %p112 = pnand %p110, %p111
    %p113 = pneg %p112
    // Predicated region
    $region9: #{iou_loss.1} parent=5 // pred_check
      _
    $region10: #{iou_loss.1} parent=5 // pred_check_branch
      %115 = sbr.rel (%p112) target = $region12
    $region11: #{iou_loss.1} parent=5 // pred_region
      %s116 = ssub.s32 %s8, 1
    $region12: #{iou_loss.1} parent=5 // pred_fallthru
      _
    %p117 = scmp.lt.s32.totalorder %s8, 2
    // Predicated region
    $region13: #{iou_loss.1} parent=5 // pred_check
      %p118 = pneg %p117
    $region14: #{iou_loss.1} parent=5 // pred_check_branch
      %120 = sbr.rel (%p118) target = $region16
    $region15: #{iou_loss.1} parent=5 // pred_region
      // Predicated region
      $region17: #{iou_loss.1} parent=15 // pred_check
        %p121 = pneg %p42
      $region18: #{iou_loss.1} parent=15 // pred_check_branch
        %123 = sbr.rel (%p121) target = $region20
      $region19: #{iou_loss.1} parent=15 // pred_region
        %s124 = smul.u32 2, %s16
        %p125 = scmp.lt.s32.totalorder %s15, 1
        %s126 = scalar_select %p125, %s15, 1
        %p127 = scmp.lt.s32.totalorder %s124, 1
        %s128 = scalar_select %p127, %s124, 1
        %s129 = smul.addr %s126, 2
        %s130 = sadd.s32 %s128, %s129
        %s131 = smul.addr %s130, 4
        %s132 = scalar_lea.vmem %s0, %s131
        %s133 = smul.u32 2, %s16
      $region20: #{iou_loss.1} parent=15 // pred_fallthru
        _
      // Predicated region
      $region21: #{iou_loss.1} parent=15 // pred_check
        %p134 = pneg %p70
      $region22: #{iou_loss.1} parent=15 // pred_check_branch
        %136 = sbr.rel (%p134) target = $region24
      $region23: #{iou_loss.1} parent=15 // pred_region
        %s137 = smul.u32 2, %s16
        %p138 = scmp.lt.s32.totalorder %s15, 1
        %s139 = scalar_select %p138, %s15, 1
        %p140 = scmp.lt.s32.totalorder %s137, 1
        %s141 = scalar_select %p140, %s137, 1
        %s142 = smul.addr %s139, 2
        %s143 = sadd.s32 %s141, %s142
        %s144 = scalar_lea.vmem %s1, %s143
        %s145 = smul.u32 2, %s16
      $region24: #{iou_loss.1} parent=15 // pred_fallthru
        _
    $region16: #{iou_loss.1} parent=5 // pred_fallthru
      _
    %p146 = scmp.le.s32.totalorder 1, %s8
    %p147 = scmp.lt.s32.totalorder %s8, 3
    %p148 = pnand %p146, %p147
    %p149 = pneg %p148
    // Predicated region
    $region25: #{iou_loss.1} parent=5 // pred_check
      _
    $region26: #{iou_loss.1} parent=5 // pred_check_branch
      %151 = sbr.rel (%p148) target = $region28
    $region27: #{iou_loss.1} parent=5 // pred_region
      %s152 = ssub.s32 %s8, 1
      %s153 = smul.u32 2, %s18
      %p154 = scmp.lt.s32.totalorder %s17, 1
      %s155 = scalar_select %p154, %s17, 1
      %p156 = scmp.lt.s32.totalorder %s153, 1
      %s157 = scalar_select %p156, %s153, 1
      %s158 = smul.addr %s155, 2
      %s159 = sadd.s32 %s157, %s158
      %s160 = smul.addr %s159, 4
      %s161 = scalar_lea.vmem %s0, %s160
      %p162 = pneg %p48
      %p163 = pneg %p45
      %s164 = smul.u32 2, %s18
      %p165 = scmp.lt.s32.totalorder %s17, 1
      %s166 = scalar_select %p165, %s17, 1
      %p167 = scmp.lt.s32.totalorder %s164, 1
      %s168 = scalar_select %p167, %s164, 1
      %s169 = smul.addr %s166, 2
      %s170 = sadd.s32 %s168, %s169
      %s171 = scalar_lea.vmem %s1, %s170
      %p172 = pneg %p76
      %p173 = pneg %p73
      %p174 = pneg %p102
      %p175 = pneg %p99
      %p176 = scmp.lt.s32.totalorder %s17, 1
      %s177 = scalar_select %p176, %s17, 1
      %s178 = smul.addr %s177, 4
      %s179 = scalar_lea.vmem %s2, %s178
      %s180 = smul.u32 2, %s18
      %p181 = scmp.lt.s32.totalorder %s17, 1
      %s182 = scalar_select %p181, %s17, 1
      %p183 = scmp.lt.s32.totalorder %s180, 1
      %s184 = scalar_select %p183, %s180, 1
      %s185 = smul.addr %s182, 2
      %s186 = sadd.s32 %s184, %s185
      %s187 = smul.addr %s186, 4
      %s188 = scalar_lea.vmem %s0, %s187
      %s189 = smul.u32 2, %s18
      %s190 = smul.u32 2, %s18
      %p191 = scmp.lt.s32.totalorder %s17, 1
      %s192 = scalar_select %p191, %s17, 1
      %p193 = scmp.lt.s32.totalorder %s190, 1
      %s194 = scalar_select %p193, %s190, 1
      %s195 = smul.addr %s192, 2
      %s196 = sadd.s32 %s194, %s195
      %s197 = scalar_lea.vmem %s1, %s196
      %s198 = smul.u32 2, %s18
      %p199 = scmp.lt.s32.totalorder %s17, 1
      %s200 = scalar_select %p199, %s17, 1
      %s201 = smul.addr %s200, 4
      %s202 = scalar_lea.vmem %s2, %s201
      %p203 = scmp.eq.s32.totalorder %s18, 0
      // Predicated region
      $region29: #{iou_loss.1} parent=27 // pred_check
        %p204 = pneg %p203
      $region30: #{iou_loss.1} parent=27 // pred_check_branch
        %206 = sbr.rel (%p204) target = $region32
      $region31: #{iou_loss.1} parent=27 // pred_region
        %207 = vst [vmem:[#allocation2] sm:$0xff] 0.0
        %208 = vst [vmem:[#allocation2 + $0x8] sm:$0xf] 0.0
      $region32: #{iou_loss.1} parent=27 // pred_fallthru
        _
      %v209 = vlaneseq
      %v210 = vshrl.u32 %v209, 7
      %v211 = vld [vmem:[%s188] sm:$0xff]
      %v212 = vld [vmem:[%s197] sm:$0x3]
      %v213 = vlaneseq
      %v214 = vshrl.u32 %v213, 7
      %v215 = vsub.s32 0, %v214
      %v216 = vrot.slane %v212, %v215
      %v217 = vlaneseq
      %v218 = vshrl.u32 %v217, 7
      %v219 = vsub.s32 1, %v218
      %v220 = vrot.slane %v212, %v219
      %vm221 = vcmp.eq.s32.totalorder %v216, %v210
      %vm222 = vcmp.eq.s32.totalorder %v220, %v210
      %v224 = vcombine.high %v211, %v211
      %v226 = vsel %vm221, %v211, 0.0
      %v227 = vsel %vm222, %v224, 0.0
      %v228 = vadd.f32 %v226, %v227
      %v229 = vadd.f32 %v228, 0.0
      %v230 = vrot.slane %v211, 4
      %v232 = vadd.f32 %v211, %v230
      %v233 = vadd.f32 %v232, 0.0
      %v234 = vsel %vm221, 1, 0
      %v235 = vsel %vm222, 1, 0
      %v236 = vcvt.s32.f32 %v234
      %v237 = vcvt.s32.f32 %v235
      %v238 = vadd.f32 %v236, %v237
      %v239 = vadd.f32 %v238, 0.0
      %v240 = vld [vmem:[#allocation2] sm:$0xff]
      %v241 = vld [vmem:[#allocation2 + $0x8] sm:$0xf]
      %v244 = vcombine.low %v229, %v233
      %v246 = vadd.f32 %v240, %v244
      %v247 = vadd.f32 %v241, %v239
      %248 = vst [vmem:[#allocation2] sm:$0xff] %v246
      %249 = vst [vmem:[#allocation2 + $0x8] sm:$0xf] %v247
      // Predicated region
      $region33: #{iou_loss.1} parent=27 // pred_check
        %p250 = pneg %p203
      $region34: #{iou_loss.1} parent=27 // pred_check_branch
        %252 = sbr.rel (%p250) target = $region36
      $region35: #{iou_loss.1} parent=27 // pred_region
        %v253 = vld [vmem:[#allocation2] sm:$0xff]
        %v254 = vld [vmem:[#allocation2 + $0x8] sm:$0xf]
        %vm255 = vcmask 1043456
        %v256 = vsel %vm255, %v253, 0.0
        %257 = vadd.xlane.f32.xlu0 %v256
        %v258 = vpop.xlane.xlu0 %257
        %v260 = vcombine.high %v253, %v253
        %v262 = vsel %vm255, %v260, 0.0
        %263 = vadd.xlane.f32.xlu0 %v262
        %v264 = vpop.xlane.xlu0 %263
        %v265 = vsel %vm255, %v254, 0.0
        %266 = vadd.xlane.f32.xlu0 %v265
        %v267 = vpop.xlane.xlu0 %266
        %vm268 = vcmask 7168
        %v269 = vsel %vm268, %v258, %v264
        %vm270 = vcmask 15360
        %v271 = vsel %vm270, %v269, %v267
        %vm272 = vcmask 19456
        %273 = vst.msk [vmem:[%s202] sm:$0xf] %vm272, %v271
      $region36: #{iou_loss.1} parent=27 // pred_fallthru
        _
      %p274 = scmp.lt.s32.totalorder %s17, 1
      %s275 = scalar_select %p274, %s17, 1
      %s276 = smul.addr %s275, 4
      %s277 = scalar_lea.vmem %s2, %s276
      // Predicated region
      $region37: #{iou_loss.1} parent=27 // pred_check
        %p278 = pneg %p99
      $region38: #{iou_loss.1} parent=27 // pred_check_branch
        %280 = sbr.rel (%p278) target = $region40
      $region39: #{iou_loss.1} parent=27 // pred_region
        _
      $region40: #{iou_loss.1} parent=27 // pred_fallthru
        _
    $region28: #{iou_loss.1} parent=5 // pred_fallthru
      _
    %p281 = scmp.le.s32.totalorder 2, %s8
    // Predicated region
    $region41: #{iou_loss.1} parent=5 // pred_check
      %p282 = pneg %p281
    $region42: #{iou_loss.1} parent=5 // pred_check_branch
      %284 = sbr.rel (%p282) target = $region44
    $region43: #{iou_loss.1} parent=5 // pred_region
      %s285 = ssub.s32 %s8, 2
      // Predicated region
      $region45: #{iou_loss.1} parent=43 // pred_check
        %p286 = pneg %p105
      $region46: #{iou_loss.1} parent=43 // pred_check_branch
        %288 = sbr.rel (%p286) target = $region48
      $region47: #{iou_loss.1} parent=43 // pred_region
        %p289 = scmp.lt.s32.totalorder %s19, 1
        %s290 = scalar_select %p289, %s19, 1
        %s291 = smul.addr %s290, 4
        %s292 = scalar_lea.vmem %s2, %s291
      $region48: #{iou_loss.1} parent=43 // pred_fallthru
        _
    $region44: #{iou_loss.1} parent=5 // pred_fallthru
      _
  $region6: #{iou_loss.1} parent=0 // loop_footer
    %s12 = sadd.s32 1, %s8
  $region7: #{iou_loss.1} parent=0 // loop_footer_branch
    %7 = sbr.rel target = $region3
  $region8: #{iou_loss.1} parent=0 // loop_exit
    _

</llo_original>
